<compile_context>
chip_gen: v7x
topology: tpu7x:2x2x1
jax: 0.10.0
libtpu: 0.0.40
codegen_flags: <defaults>
</compile_context>

<pallas_src>
import functools

import jax
import jax.numpy as jnp
from jax.experimental import pallas as pl
from jax.experimental.pallas import tpu as pltpu


def _round_up(x, m):
    return ((x + m - 1) // m) * m


def _sub_classifier_kernel(x_ref, w1_ref, b1_ref, gamma_ref, beta_ref,
                           w2_ref, b2_ref, proj_ref, out_ref, acc_ref,
                           *, b_true):
    """Grid axis 0 tiles the D_in reduction of linear1.

    x_ref:  (B_pad, tk)      bf16 tile of flattened input
    w1_ref: (tk, P_pad)      bf16 tile of linear1 weight
    b1/gamma/beta: (1, P_pad) f32
    w2_ref: (P_pad, NC_pad)  bf16
    b2_ref: (1, NC_pad)      f32
    proj_ref: (B_pad, P_pad) f32 output (linear1 result, pre-BN)
    out_ref:  (B_pad, NC_pad) f32 output
    acc_ref:  (B_pad, P_pad) f32 VMEM accumulator
    """
    k = pl.program_id(0)

    @pl.when(k == 0)
    def _():
        acc_ref[...] = jnp.zeros_like(acc_ref)

    # Partial linear1 contribution for this K tile (MXU, f32 accumulation).
    acc_ref[...] += jnp.dot(x_ref[...], w1_ref[...],
                            preferred_element_type=jnp.float32)

    @pl.when(k == pl.num_programs(0) - 1)
    def _():
        proj = acc_ref[...] + b1_ref[...]
        proj_ref[...] = proj

        # BatchNorm1d (training mode): batch mean / biased variance over the
        # TRUE batch rows only; padded rows are masked out and the divisor is
        # the real batch size, so numerics match PyTorch exactly.
        row_ids = jax.lax.broadcasted_iota(jnp.int32, proj.shape, 0)
        mask = (row_ids < b_true).astype(jnp.float32)
        inv_b = jnp.float32(1.0 / b_true)

        mean = jnp.sum(proj * mask, axis=0, keepdims=True) * inv_b
        centered_masked = (proj - mean) * mask
        var = jnp.sum(centered_masked * centered_masked, axis=0,
                      keepdims=True) * inv_b
        xhat = (proj - mean) * jax.lax.rsqrt(var + 1e-5)
        bn = xhat * gamma_ref[...] + beta_ref[...]

        # ReLU
        h = jnp.maximum(bn, 0.0)

        # linear2: (B_pad, P_pad) @ (P_pad, NC_pad) + (1, NC_pad)
        out = jnp.dot(h.astype(w2_ref.dtype), w2_ref[...],
                      preferred_element_type=jnp.float32) + b2_ref[...]
        out_ref[...] = out


def sub_classifier_forward(x, w1, b1, gamma, beta, w2, b2):
    """x: (B, C, H, W) float32. Returns (projected (B, P), output (B, NC))."""
    B = x.shape[0]
    x_flat = x.reshape(B, -1)            # nn.Flatten (row-major C*H*W)
    d_in = x_flat.shape[1]
    P = w1.shape[1]
    NC = w2.shape[1]

    # ---- padding to TPU-friendly shapes --------------------------------------
    B_pad = _round_up(B, 8)              # f32 sublane
    P_pad = _round_up(P, 128)            # lane-dense proj / MXU N
    NC_pad = _round_up(NC, 128)          # lane-dense out

    # K tile of the D_in reduction; 512 measured near HBM roofline, and the
    # double-buffered bf16 tiles (2 * (tk*P_pad + B_pad*tk) * 2B < 0.5 MiB here)
    # fit comfortably inside every generation's scoped-VMEM default.
    tk = 512 if d_in >= 512 else _round_up(d_in, 128)
    d_in_pad = _round_up(d_in, tk)
    num_k = d_in_pad // tk

    # Zero-pad operands; zeros contribute nothing to the matmuls, and the
    # kernel masks padded batch rows out of the BN statistics.
    x_p = jnp.zeros((B_pad, d_in_pad), jnp.float32).at[:B, :d_in].set(x_flat)
    w1_p = jnp.zeros((d_in_pad, P_pad), jnp.float32).at[:d_in, :P].set(w1)
    w2_p = jnp.zeros((P_pad, NC_pad), jnp.float32).at[:P, :NC].set(w2)
    b1_p = jnp.zeros((1, P_pad), jnp.float32).at[0, :P].set(b1)
    gamma_p = jnp.zeros((1, P_pad), jnp.float32).at[0, :P].set(gamma)
    beta_p = jnp.zeros((1, P_pad), jnp.float32).at[0, :P].set(beta)
    b2_p = jnp.zeros((1, NC_pad), jnp.float32).at[0, :NC].set(b2)

    # bf16 matmul inputs (f32 accumulation in-kernel); BN math stays f32.
    x_bf = x_p.astype(jnp.bfloat16)
    w1_bf = w1_p.astype(jnp.bfloat16)
    w2_bf = w2_p.astype(jnp.bfloat16)

    kernel = functools.partial(_sub_classifier_kernel, b_true=B)

    grid_spec = pltpu.PrefetchScalarGridSpec(
        num_scalar_prefetch=0,
        grid=(num_k,),
        in_specs=[
            pl.BlockSpec((B_pad, tk), lambda k: (0, k)),        # x tile
            pl.BlockSpec((tk, P_pad), lambda k: (k, 0)),        # w1 tile
            pl.BlockSpec((1, P_pad), lambda k: (0, 0)),         # b1
            pl.BlockSpec((1, P_pad), lambda k: (0, 0)),         # gamma
            pl.BlockSpec((1, P_pad), lambda k: (0, 0)),         # beta
            pl.BlockSpec((P_pad, NC_pad), lambda k: (0, 0)),    # w2
            pl.BlockSpec((1, NC_pad), lambda k: (0, 0)),        # b2
        ],
        out_specs=(
            pl.BlockSpec((B_pad, P_pad), lambda k: (0, 0)),     # proj
            pl.BlockSpec((B_pad, NC_pad), lambda k: (0, 0)),    # out
        ),
        scratch_shapes=[pltpu.VMEM((B_pad, P_pad), jnp.float32)],
    )

    proj_p, out_p = pl.pallas_call(
        kernel,
        out_shape=(jax.ShapeDtypeStruct((B_pad, P_pad), jnp.float32),
                   jax.ShapeDtypeStruct((B_pad, NC_pad), jnp.float32)),
        grid_spec=grid_spec,
        compiler_params=pltpu.CompilerParams(
            dimension_semantics=("arbitrary",)),
    )(x_bf, w1_bf, b1_p, gamma_p, beta_p, w2_bf, b2_p)

    return proj_p[:B, :P], out_p[:B, :NC]


def make_params(key, input_size, projected_size, num_classes):
    k1, k2, k3, k4 = jax.random.split(key, 4)
    bound1 = 1.0 / (input_size ** 0.5)
    w1 = jax.random.uniform(k1, (input_size, projected_size), jnp.float32, -bound1, bound1)
    b1 = jax.random.uniform(k2, (projected_size,), jnp.float32, -bound1, bound1)
    bound2 = 1.0 / (projected_size ** 0.5)
    w2 = jax.random.uniform(k3, (projected_size, num_classes), jnp.float32, -bound2, bound2)
    b2 = jax.random.uniform(k4, (num_classes,), jnp.float32, -bound2, bound2)
    gamma = jnp.ones((projected_size,), jnp.float32)   # BatchNorm1d affine init
    beta = jnp.zeros((projected_size,), jnp.float32)
    return w1, b1, gamma, beta, w2, b2


if __name__ == "__main__":
    key = jax.random.PRNGKey(0)
    kx, kp = jax.random.split(key)

    B, C, H, W = 2, 4, 16, 16
    input_size = C * H * W          # 1024
    projected_size = 32
    num_classes = 10

    x = jax.random.normal(kx, (B, C, H, W), jnp.float32)
    w1, b1, gamma, beta, w2, b2 = make_params(kp, input_size, projected_size, num_classes)

    proj, out = sub_classifier_forward(x, w1, b1, gamma, beta, w2, b2)
    jax.block_until_ready((proj, out))

    assert proj.shape == (B, projected_size)
    assert out.shape == (B, num_classes)
    assert bool(jnp.all(jnp.isfinite(proj))) and bool(jnp.all(jnp.isfinite(out)))
    print("KERNEL_OK")
</pallas_src>

<mosaic_0001>
module attributes {stable_mosaic.version = 11 : i64} {
  func.func @_sub_classifier_kernel(%arg0: i32, %arg1: memref<8x512xbf16, #tpu.memory_space<vmem>>, %arg2: memref<512x128xbf16, #tpu.memory_space<vmem>>, %arg3: memref<1x128xf32, #tpu.memory_space<vmem>>, %arg4: memref<1x128xf32, #tpu.memory_space<vmem>>, %arg5: memref<1x128xf32, #tpu.memory_space<vmem>>, %arg6: memref<128x128xbf16, #tpu.memory_space<vmem>>, %arg7: memref<1x128xf32, #tpu.memory_space<vmem>>, %arg8: memref<8x128xf32, #tpu.memory_space<vmem>>, %arg9: memref<8x128xf32, #tpu.memory_space<vmem>>, %arg10: memref<8x128xf32, #tpu.memory_space<vmem>>) attributes {dimension_semantics = [#tpu.dimension_semantics<arbitrary>], iteration_bounds = array<i64: 2>, scalar_prefetch = 0 : i64, scratch_operands = 1 : i64, tpu.core_type = #tpu.core_type<tc>, window_params = [{transform_indices = @transform_0, window_bounds = array<i64: 8, 512>}, {transform_indices = @transform_1, window_bounds = array<i64: 512, 128>}, {pipeline_mode = #tpu.pipeline_mode<synchronous>, transform_indices = @transform_2, window_bounds = array<i64: 1, 128>}, {pipeline_mode = #tpu.pipeline_mode<synchronous>, transform_indices = @transform_3, window_bounds = array<i64: 1, 128>}, {pipeline_mode = #tpu.pipeline_mode<synchronous>, transform_indices = @transform_4, window_bounds = array<i64: 1, 128>}, {pipeline_mode = #tpu.pipeline_mode<synchronous>, transform_indices = @transform_5, window_bounds = array<i64: 128, 128>}, {pipeline_mode = #tpu.pipeline_mode<synchronous>, transform_indices = @transform_6, window_bounds = array<i64: 1, 128>}, {pipeline_mode = #tpu.pipeline_mode<synchronous>, transform_indices = @transform_7, window_bounds = array<i64: 8, 128>}, {pipeline_mode = #tpu.pipeline_mode<synchronous>, transform_indices = @transform_8, window_bounds = array<i64: 8, 128>}]} {
    %c0_i32 = arith.constant 0 : i32
    %0 = arith.cmpi eq, %arg0, %c0_i32 : i32
    %1 = arith.extui %0 : i1 to i32
    %c0_i32_0 = arith.constant 0 : i32
    %2 = arith.cmpi ne, %1, %c0_i32_0 : i32
    scf.if %2 {
      %cst_9 = arith.constant 0.000000e+00 : f32
      %12 = vector.broadcast %cst_9 : f32 to vector<8x128xf32>
      %c0_10 = arith.constant 0 : index
      %c0_11 = arith.constant 0 : index
      %13 = vector.load %arg10[%c0_10, %c0_11] : memref<8x128xf32, #tpu.memory_space<vmem>>, vector<8x128xf32>
      tpu.vector_store %arg10[%c0_10, %c0_11], %12 {strides = array<i32>} : memref<8x128xf32, #tpu.memory_space<vmem>>, vector<8x128xf32>,
    } else {
    }
    %c0 = arith.constant 0 : index
    %c0_1 = arith.constant 0 : index
    %3 = vector.load %arg10[%c0, %c0_1] : memref<8x128xf32, #tpu.memory_space<vmem>>, vector<8x128xf32>
    %c0_2 = arith.constant 0 : index
    %c0_3 = arith.constant 0 : index
    %4 = vector.load %arg1[%c0_2, %c0_3] : memref<8x512xbf16, #tpu.memory_space<vmem>>, vector<8x512xbf16>
    %c0_4 = arith.constant 0 : index
    %c0_5 = arith.constant 0 : index
    %5 = vector.load %arg2[%c0_4, %c0_5] : memref<512x128xbf16, #tpu.memory_space<vmem>>, vector<512x128xbf16>
    %cst = arith.constant dense<0.000000e+00> : vector<8x128xf32>
    %6 = tpu.matmul %4, %5, %cst {dimension_numbers = #tpu.dot_dimension_numbers<[1], [0], [0], [1], [0, 0, 1, 1], [], []>} : vector<8x512xbf16>, vector<512x128xbf16>, vector<8x128xf32> -> vector<8x128xf32>
    %7 = arith.addf %3, %6 : vector<8x128xf32>
    %c0_6 = arith.constant 0 : index
    %c0_7 = arith.constant 0 : index
    %8 = vector.load %arg10[%c0_6, %c0_7] : memref<8x128xf32, #tpu.memory_space<vmem>>, vector<8x128xf32>
    tpu.vector_store %arg10[%c0_6, %c0_7], %7 {strides = array<i32>} : memref<8x128xf32, #tpu.memory_space<vmem>>, vector<8x128xf32>,
    %c1_i32 = arith.constant 1 : i32
    %9 = arith.cmpi eq, %arg0, %c1_i32 : i32
    %10 = arith.extui %9 : i1 to i32
    %c0_i32_8 = arith.constant 0 : i32
    %11 = arith.cmpi ne, %10, %c0_i32_8 : i32
    scf.if %11 {
      %c0_9 = arith.constant 0 : index
      %c0_10 = arith.constant 0 : index
      %12 = vector.load %arg10[%c0_9, %c0_10] : memref<8x128xf32, #tpu.memory_space<vmem>>, vector<8x128xf32>
      %c0_11 = arith.constant 0 : index
      %c0_12 = arith.constant 0 : index
      %13 = vector.load %arg3[%c0_11, %c0_12] : memref<1x128xf32, #tpu.memory_space<vmem>>, vector<1x128xf32>
      %14 = vector.broadcast %13 : vector<1x128xf32> to vector<8x128xf32>
      %15 = arith.addf %12, %14 : vector<8x128xf32>
      %c0_13 = arith.constant 0 : index
      %c0_14 = arith.constant 0 : index
      %16 = vector.load %arg8[%c0_13, %c0_14] : memref<8x128xf32, #tpu.memory_space<vmem>>, vector<8x128xf32>
      tpu.vector_store %arg8[%c0_13, %c0_14], %15 {strides = array<i32>} : memref<8x128xf32, #tpu.memory_space<vmem>>, vector<8x128xf32>,
      %17 = tpu.iota {dimensions = array<i32: 0>} : vector<8x128xi32>
      %c2_i32 = arith.constant 2 : i32
      %18 = vector.broadcast %c2_i32 : i32 to vector<8x128xi32>
      %19 = arith.cmpi slt, %17, %18 : vector<8x128xi32>
      %20 = arith.extui %19 : vector<8x128xi1> to vector<8x128xi32>
      %21 = arith.sitofp %20 : vector<8x128xi32> to vector<8x128xf32>
      %22 = arith.mulf %15, %21 : vector<8x128xf32>
      %cst_15 = arith.constant dense<0.000000e+00> : vector<128xf32>
      %23 = vector.multi_reduction <add>, %22, %cst_15 [0] : vector<8x128xf32> to vector<128xf32>
      %24 = vector.shape_cast %23 : vector<128xf32> to vector<1x128xf32>
      %cst_16 = arith.constant 5.000000e-01 : f32
      %25 = vector.broadcast %cst_16 : f32 to vector<1x128xf32>
      %26 = arith.mulf %24, %25 : vector<1x128xf32>
      %27 = vector.broadcast %26 : vector<1x128xf32> to vector<8x128xf32>
      %28 = arith.subf %15, %27 : vector<8x128xf32>
      %29 = arith.mulf %28, %21 : vector<8x128xf32>
      %30 = arith.mulf %29, %29 : vector<8x128xf32>
      %cst_17 = arith.constant dense<0.000000e+00> : vector<128xf32>
      %31 = vector.multi_reduction <add>, %30, %cst_17 [0] : vector<8x128xf32> to vector<128xf32>
      %32 = vector.shape_cast %31 : vector<128xf32> to vector<1x128xf32>
      %cst_18 = arith.constant 5.000000e-01 : f32
      %33 = vector.broadcast %cst_18 : f32 to vector<1x128xf32>
      %34 = arith.mulf %32, %33 : vector<1x128xf32>
      %35 = vector.broadcast %26 : vector<1x128xf32> to vector<8x128xf32>
      %36 = arith.subf %15, %35 : vector<8x128xf32>
      %cst_19 = arith.constant 9.99999974E-6 : f32
      %37 = vector.broadcast %cst_19 : f32 to vector<1x128xf32>
      %38 = arith.addf %34, %37 : vector<1x128xf32>
      %39 = math.rsqrt %38 : vector<1x128xf32>
      %40 = vector.broadcast %39 : vector<1x128xf32> to vector<8x128xf32>
      %41 = arith.mulf %36, %40 : vector<8x128xf32>
      %c0_20 = arith.constant 0 : index
      %c0_21 = arith.constant 0 : index
      %42 = vector.load %arg4[%c0_20, %c0_21] : memref<1x128xf32, #tpu.memory_space<vmem>>, vector<1x128xf32>
      %43 = vector.broadcast %42 : vector<1x128xf32> to vector<8x128xf32>
      %44 = arith.mulf %41, %43 : vector<8x128xf32>
      %c0_22 = arith.constant 0 : index
      %c0_23 = arith.constant 0 : index
      %45 = vector.load %arg5[%c0_22, %c0_23] : memref<1x128xf32, #tpu.memory_space<vmem>>, vector<1x128xf32>
      %46 = vector.broadcast %45 : vector<1x128xf32> to vector<8x128xf32>
      %47 = arith.addf %44, %46 : vector<8x128xf32>
      %cst_24 = arith.constant 0.000000e+00 : f32
      %48 = vector.broadcast %cst_24 : f32 to vector<8x128xf32>
      %49 = arith.maximumf %47, %48 : vector<8x128xf32>
      %50 = arith.truncf %49 : vector<8x128xf32> to vector<8x128xbf16>
      %c0_25 = arith.constant 0 : index
      %c0_26 = arith.constant 0 : index
      %51 = vector.load %arg6[%c0_25, %c0_26] : memref<128x128xbf16, #tpu.memory_space<vmem>>, vector<128x128xbf16>
      %cst_27 = arith.constant dense<0.000000e+00> : vector<8x128xf32>
      %52 = tpu.matmul %50, %51, %cst_27 {dimension_numbers = #tpu.dot_dimension_numbers<[1], [0], [0], [1], [0, 0, 1, 1], [], []>} : vector<8x128xbf16>, vector<128x128xbf16>, vector<8x128xf32> -> vector<8x128xf32>
      %c0_28 = arith.constant 0 : index
      %c0_29 = arith.constant 0 : index
      %53 = vector.load %arg7[%c0_28, %c0_29] : memref<1x128xf32, #tpu.memory_space<vmem>>, vector<1x128xf32>
      %54 = vector.broadcast %53 : vector<1x128xf32> to vector<8x128xf32>
      %55 = arith.addf %52, %54 : vector<8x128xf32>
      %c0_30 = arith.constant 0 : index
      %c0_31 = arith.constant 0 : index
      %56 = vector.load %arg9[%c0_30, %c0_31] : memref<8x128xf32, #tpu.memory_space<vmem>>, vector<8x128xf32>
      tpu.vector_store %arg9[%c0_30, %c0_31], %55 {strides = array<i32>} : memref<8x128xf32, #tpu.memory_space<vmem>>, vector<8x128xf32>,
    } else {
    }
    return
  }
  func.func @transform_0(%arg0: i32) -> (i32, i32) {
    %c0_i32 = arith.constant 0 : i32
    %c0_i32_0 = arith.constant 0 : i32
    return %c0_i32, %arg0 : i32, i32
  }
  func.func @transform_1(%arg0: i32) -> (i32, i32) {
    %c0_i32 = arith.constant 0 : i32
    %c0_i32_0 = arith.constant 0 : i32
    return %arg0, %c0_i32 : i32, i32
  }
  func.func @transform_2(%arg0: i32) -> (i32, i32) {
    %c0_i32 = arith.constant 0 : i32
    %c0_i32_0 = arith.constant 0 : i32
    %c0_i32_1 = arith.constant 0 : i32
    return %c0_i32, %c0_i32_0 : i32, i32
  }
  func.func @transform_3(%arg0: i32) -> (i32, i32) {
    %c0_i32 = arith.constant 0 : i32
    %c0_i32_0 = arith.constant 0 : i32
    %c0_i32_1 = arith.constant 0 : i32
    return %c0_i32, %c0_i32_0 : i32, i32
  }
  func.func @transform_4(%arg0: i32) -> (i32, i32) {
    %c0_i32 = arith.constant 0 : i32
    %c0_i32_0 = arith.constant 0 : i32
    %c0_i32_1 = arith.constant 0 : i32
    return %c0_i32, %c0_i32_0 : i32, i32
  }
  func.func @transform_5(%arg0: i32) -> (i32, i32) {
    %c0_i32 = arith.constant 0 : i32
    %c0_i32_0 = arith.constant 0 : i32
    %c0_i32_1 = arith.constant 0 : i32
    return %c0_i32, %c0_i32_0 : i32, i32
  }
  func.func @transform_6(%arg0: i32) -> (i32, i32) {
    %c0_i32 = arith.constant 0 : i32
    %c0_i32_0 = arith.constant 0 : i32
    %c0_i32_1 = arith.constant 0 : i32
    return %c0_i32, %c0_i32_0 : i32, i32
  }
  func.func @transform_7(%arg0: i32) -> (i32, i32) {
    %c0_i32 = arith.constant 0 : i32
    %c0_i32_0 = arith.constant 0 : i32
    %c0_i32_1 = arith.constant 0 : i32
    return %c0_i32, %c0_i32_0 : i32, i32
  }
  func.func @transform_8(%arg0: i32) -> (i32, i32) {
    %c0_i32 = arith.constant 0 : i32
    %c0_i32_0 = arith.constant 0 : i32
    %c0_i32_1 = arith.constant 0 : i32
    return %c0_i32, %c0_i32_0 : i32, i32
  }
}

</mosaic_0001>

<llo_original>
// kernel: tpu_custom_call.1
$region0: #{tpu_custom_call.1}
  #allocation0 [shape = 'u32[]', space=smem, size = 0x4, offset = 0x4, fixed_abs, tag = 'smem constant byte address 0x4 - core index']
  #allocation1 [shape = 'u32[144,128]{1,0:T(1,128)}', space=vmem, size = 0x12000, scoped, tag = 'internal scratch']
  #allocation2 [shape = 'f32[8,128]{1,0:T(8,128)}', space=vmem, size = 0x1000, scoped, tag = 'scratch operand']
  %s0 = inlined_call_operand.hbm [shape: bf16[8,1024], index: 0, kind: input, shape index: {}]
  %s1 = inlined_call_operand.hbm [shape: bf16[1024,128], index: 1, kind: input, shape index: {}]
  %s2 = inlined_call_operand.vmem [shape: f32[1,128], index: 2, kind: input, shape index: {}]
  %s3 = inlined_call_operand.vmem [shape: f32[1,128], index: 3, kind: input, shape index: {}]
  %s4 = inlined_call_operand.vmem [shape: f32[1,128], index: 4, kind: input, shape index: {}]
  %s5 = inlined_call_operand.hbm [shape: bf16[128,128], index: 5, kind: input, shape index: {}]
  %s6 = inlined_call_operand.vmem [shape: f32[1,128], index: 6, kind: input, shape index: {}]
  %s7 = inlined_call_operand.hbm [shape: f32[8,128], index: 7, kind: output, shape index: {0}]
  %s8 = inlined_call_operand.hbm [shape: f32[8,128], index: 8, kind: output, shape index: {1}]
  %9 = xla_tuple %s7, %s8
  %s10 = sld [smem:[#allocation0]]
  $region89: #{tpu_custom_call.1} parent=0
    _
  %s12 = ssub.s32 1, %s10
  %s13 = scalar_select 0, %s12, %s10
  $region1: #{tpu_custom_call.1} parent=0
    #allocation3 [shape = 'u8[16384]{0}', space=vmem, size = 0x4000, scoped, tag = 'input window, operand 0']
    #allocation4 [shape = 's32[2]{0}', space=sflag, size = 0x8, scoped, tag = 'scoped memory for tpu_custom_call.1']
    #allocation5 [shape = 's32[2]{0}', space=sflag, size = 0x8, scoped, tag = 'scoped memory for tpu_custom_call.1']
    #allocation6 [shape = 'u8[262144]{0}', space=vmem, size = 0x40000, scoped, tag = 'input window, operand 1']
    #allocation7 [shape = 's32[2]{0}', space=sflag, size = 0x8, scoped, tag = 'scoped memory for tpu_custom_call.1']
    #allocation8 [shape = 'u8[32768]{0}', space=vmem, size = 0x8000, scoped, tag = 'input window, operand 5, single buffered']
    #allocation9 [shape = 'u8[4096]{0}', space=vmem, size = 0x1000, scoped, tag = 'output window, operand 0, single buffered']
    #allocation10 [shape = 'u8[4096]{0}', space=vmem, size = 0x1000, scoped, tag = 'output window, operand 1, single buffered']
    #allocation11 [shape = 's32[1]{0}', space=sflag, size = 0x4, scoped, tag = 'scoped memory for tpu_custom_call.1']
    %14 = vsyncpa [#allocation4], 0
    %s15 = scalar_lea.sflag [#allocation4], 1
    %16 = vsyncpa %s15, 0
    %17 = vsyncpa [#allocation7], 0
    %s18 = scalar_lea.sflag [#allocation7], 1
    %19 = vsyncpa %s18, 0
    %20 = vsyncpa [#allocation5], 0
    %21 = vsyncpa [#allocation11], 0
    loop: start=0, step=1, limit=4
    $region2: #{tpu_custom_call.1} parent=1 // loop_pre_header
      _
    $region3: #{tpu_custom_call.1} parent=1 // loop_header
      %s23 = sphi 0, %s27
      %p24 = scmp.ge.s32.totalorder %s23, 4
      %s33 = sphi 0, %s35
      %s36 = sphi 0, %s33
      %s37 = sphi 0, %s36
      %s53 = sphi 0, %s37
      %s59 = sphi 0, %s61
      %s62 = sphi 0, %s59
      %s63 = sphi 0, %s62
      %s79 = sphi 0, %s63
      %s83 = sphi 0, %s83
      %s85 = sphi 0, %s83
      %s86 = sphi 0, %s85
      %s100 = sphi 0, %s86
      %s104 = sphi 0, %s104
      %s106 = sphi 0, %s104
      %s107 = sphi 0, %s106
      %s121 = sphi 0, %s107
      %s125 = sphi 0, %s125
      %s127 = sphi 0, %s125
      %s128 = sphi 0, %s127
      %s142 = sphi 0, %s128
      %s146 = sphi 0, %s146
      %s148 = sphi 0, %s146
      %s149 = sphi 0, %s148
      %s163 = sphi 0, %s149
      %s167 = sphi 0, %s167
      %s169 = sphi 0, %s167
      %s170 = sphi 0, %s169
      %s184 = sphi 0, %s170
      %s188 = sphi 0, %s188
      %s190 = sphi 0, %s188
      %s191 = sphi 0, %s190
      %s205 = sphi 0, %s191
      %s209 = sphi 0, %s209
      %s211 = sphi 0, %s209
      %s212 = sphi 0, %s211
      %s226 = sphi 0, %s212
    $region4: #{tpu_custom_call.1} parent=1 // loop_header_branch
      %26 = sbr.rel (%p24) target = $region8
    $region5: #{tpu_custom_call.1} parent=1 // loop_body
      %s28 = ssub.s32 %s23, 1
      %s29 = ssub.s32 %s23, 2
      %s30 = sadd.s32 %s23, 1
      %s31 = ssub.s32 %s23, %s30
      %p32 = scmp.eq.s32.totalorder %s31, 0
      %s34 = sadd.s32 %s33, 1
      %s35 = scalar_select %p32, %s33, %s34
      %p38 = pneg %p32
      %p39 = scmp.eq.s32.totalorder %s23, 1
      %p40 = por %p38, %p39
      %p41 = scmp.ne.s32.totalorder %s33, %s36
      %p42 = scmp.eq.s32.totalorder %s23, 0
      %p43 = por %p41, %p42
      %p44 = scmp.ne.s32.totalorder %s33, %s36
      %p45 = scmp.eq.s32.totalorder %s28, 1
      %p46 = por %p44, %p45
      %p47 = scmp.ne.s32.totalorder %s36, %s37
      %p48 = scmp.eq.s32.totalorder %s28, 0
      %p49 = por %p47, %p48
      %p50 = scmp.ne.s32.totalorder %s36, %s37
      %p51 = scmp.eq.s32.totalorder %s29, 1
      %p52 = por %p50, %p51
      %p54 = scmp.ne.s32.totalorder %s37, %s53
      %p55 = scmp.eq.s32.totalorder %s29, 0
      %p56 = por %p54, %p55
      %s57 = ssub.s32 %s23, %s30
      %p58 = scmp.eq.s32.totalorder %s57, 0
      %s60 = sadd.s32 %s59, 1
      %s61 = scalar_select %p58, %s59, %s60
      %p64 = pneg %p58
      %p65 = scmp.eq.s32.totalorder %s23, 1
      %p66 = por %p64, %p65
      %p67 = scmp.ne.s32.totalorder %s59, %s62
      %p68 = scmp.eq.s32.totalorder %s23, 0
      %p69 = por %p67, %p68
      %p70 = scmp.ne.s32.totalorder %s59, %s62
      %p71 = scmp.eq.s32.totalorder %s28, 1
      %p72 = por %p70, %p71
      %p73 = scmp.ne.s32.totalorder %s62, %s63
      %p74 = scmp.eq.s32.totalorder %s28, 0
      %p75 = por %p73, %p74
      %p76 = scmp.ne.s32.totalorder %s62, %s63
      %p77 = scmp.eq.s32.totalorder %s29, 1
      %p78 = por %p76, %p77
      %p80 = scmp.ne.s32.totalorder %s63, %s79
      %p81 = scmp.eq.s32.totalorder %s29, 0
      %p82 = por %p80, %p81
      %s84 = sadd.s32 %s83, 1
      %p87 = scmp.eq.s32.totalorder %s23, 1
      %p88 = scmp.ne.s32.totalorder %s83, %s85
      %p89 = scmp.eq.s32.totalorder %s23, 0
      %p90 = por %p88, %p89
      %p91 = scmp.ne.s32.totalorder %s83, %s85
      %p92 = scmp.eq.s32.totalorder %s28, 1
      %p93 = por %p91, %p92
      %p94 = scmp.ne.s32.totalorder %s85, %s86
      %p95 = scmp.eq.s32.totalorder %s28, 0
      %p96 = por %p94, %p95
      %p97 = scmp.ne.s32.totalorder %s85, %s86
      %p98 = scmp.eq.s32.totalorder %s29, 1
      %p99 = por %p97, %p98
      %p101 = scmp.ne.s32.totalorder %s86, %s100
      %p102 = scmp.eq.s32.totalorder %s29, 0
      %p103 = por %p101, %p102
      %s105 = sadd.s32 %s104, 1
      %p108 = scmp.eq.s32.totalorder %s23, 1
      %p109 = scmp.ne.s32.totalorder %s104, %s106
      %p110 = scmp.eq.s32.totalorder %s23, 0
      %p111 = por %p109, %p110
      %p112 = scmp.ne.s32.totalorder %s104, %s106
      %p113 = scmp.eq.s32.totalorder %s28, 1
      %p114 = por %p112, %p113
      %p115 = scmp.ne.s32.totalorder %s106, %s107
      %p116 = scmp.eq.s32.totalorder %s28, 0
      %p117 = por %p115, %p116
      %p118 = scmp.ne.s32.totalorder %s106, %s107
      %p119 = scmp.eq.s32.totalorder %s29, 1
      %p120 = por %p118, %p119
      %p122 = scmp.ne.s32.totalorder %s107, %s121
      %p123 = scmp.eq.s32.totalorder %s29, 0
      %p124 = por %p122, %p123
      %s126 = sadd.s32 %s125, 1
      %p129 = scmp.eq.s32.totalorder %s23, 1
      %p130 = scmp.ne.s32.totalorder %s125, %s127
      %p131 = scmp.eq.s32.totalorder %s23, 0
      %p132 = por %p130, %p131
      %p133 = scmp.ne.s32.totalorder %s125, %s127
      %p134 = scmp.eq.s32.totalorder %s28, 1
      %p135 = por %p133, %p134
      %p136 = scmp.ne.s32.totalorder %s127, %s128
      %p137 = scmp.eq.s32.totalorder %s28, 0
      %p138 = por %p136, %p137
      %p139 = scmp.ne.s32.totalorder %s127, %s128
      %p140 = scmp.eq.s32.totalorder %s29, 1
      %p141 = por %p139, %p140
      %p143 = scmp.ne.s32.totalorder %s128, %s142
      %p144 = scmp.eq.s32.totalorder %s29, 0
      %p145 = por %p143, %p144
      %s147 = sadd.s32 %s146, 1
      %p150 = scmp.eq.s32.totalorder %s23, 1
      %p151 = scmp.ne.s32.totalorder %s146, %s148
      %p152 = scmp.eq.s32.totalorder %s23, 0
      %p153 = por %p151, %p152
      %p154 = scmp.ne.s32.totalorder %s146, %s148
      %p155 = scmp.eq.s32.totalorder %s28, 1
      %p156 = por %p154, %p155
      %p157 = scmp.ne.s32.totalorder %s148, %s149
      %p158 = scmp.eq.s32.totalorder %s28, 0
      %p159 = por %p157, %p158
      %p160 = scmp.ne.s32.totalorder %s148, %s149
      %p161 = scmp.eq.s32.totalorder %s29, 1
      %p162 = por %p160, %p161
      %p164 = scmp.ne.s32.totalorder %s149, %s163
      %p165 = scmp.eq.s32.totalorder %s29, 0
      %p166 = por %p164, %p165
      %s168 = sadd.s32 %s167, 1
      %p171 = scmp.eq.s32.totalorder %s23, 1
      %p172 = scmp.ne.s32.totalorder %s167, %s169
      %p173 = scmp.eq.s32.totalorder %s23, 0
      %p174 = por %p172, %p173
      %p175 = scmp.ne.s32.totalorder %s167, %s169
      %p176 = scmp.eq.s32.totalorder %s28, 1
      %p177 = por %p175, %p176
      %p178 = scmp.ne.s32.totalorder %s169, %s170
      %p179 = scmp.eq.s32.totalorder %s28, 0
      %p180 = por %p178, %p179
      %p181 = scmp.ne.s32.totalorder %s169, %s170
      %p182 = scmp.eq.s32.totalorder %s29, 1
      %p183 = por %p181, %p182
      %p185 = scmp.ne.s32.totalorder %s170, %s184
      %p186 = scmp.eq.s32.totalorder %s29, 0
      %p187 = por %p185, %p186
      %s189 = sadd.s32 %s188, 1
      %p192 = scmp.eq.s32.totalorder %s23, 1
      %p193 = scmp.ne.s32.totalorder %s188, %s190
      %p194 = scmp.eq.s32.totalorder %s23, 0
      %p195 = por %p193, %p194
      %p196 = scmp.ne.s32.totalorder %s188, %s190
      %p197 = scmp.eq.s32.totalorder %s28, 1
      %p198 = por %p196, %p197
      %p199 = scmp.ne.s32.totalorder %s190, %s191
      %p200 = scmp.eq.s32.totalorder %s28, 0
      %p201 = por %p199, %p200
      %p202 = scmp.ne.s32.totalorder %s190, %s191
      %p203 = scmp.eq.s32.totalorder %s29, 1
      %p204 = por %p202, %p203
      %p206 = scmp.ne.s32.totalorder %s191, %s205
      %p207 = scmp.eq.s32.totalorder %s29, 0
      %p208 = por %p206, %p207
      %s210 = sadd.s32 %s209, 1
      %p213 = scmp.eq.s32.totalorder %s23, 1
      %p214 = scmp.ne.s32.totalorder %s209, %s211
      %p215 = scmp.eq.s32.totalorder %s23, 0
      %p216 = por %p214, %p215
      %p217 = scmp.ne.s32.totalorder %s209, %s211
      %p218 = scmp.eq.s32.totalorder %s28, 1
      %p219 = por %p217, %p218
      %p220 = scmp.ne.s32.totalorder %s211, %s212
      %p221 = scmp.eq.s32.totalorder %s28, 0
      %p222 = por %p220, %p221
      %p223 = scmp.ne.s32.totalorder %s211, %s212
      %p224 = scmp.eq.s32.totalorder %s29, 1
      %p225 = por %p223, %p224
      %p227 = scmp.ne.s32.totalorder %s212, %s226
      %p228 = scmp.eq.s32.totalorder %s29, 0
      %p229 = por %p227, %p228
      %p230 = scmp.le.s32.totalorder 1, %s23
      %p231 = scmp.lt.s32.totalorder %s23, 3
      %p232 = pnand %p230, %p231
      %p233 = pneg %p232
      // Predicated region
      $region9: #{tpu_custom_call.1} parent=5 // pred_check
        _
      $region10: #{tpu_custom_call.1} parent=5 // pred_check_branch
        %235 = sbr.rel (%p232) target = $region12
      $region11: #{tpu_custom_call.1} parent=5 // pred_region
        %s236 = ssub.s32 %s23, 1
        // Predicated region
        $region13: #{tpu_custom_call.1} parent=11 // pred_check
          %p237 = pneg %p96
        $region14: #{tpu_custom_call.1} parent=11 // pred_check_branch
          %239 = sbr.rel (%p237) target = $region16
        $region15: #{tpu_custom_call.1} parent=11 // pred_region
          _
        $region16: #{tpu_custom_call.1} parent=11 // pred_fallthru
          _
        // Predicated region
        $region17: #{tpu_custom_call.1} parent=11 // pred_check
          %p240 = pneg %p117
        $region18: #{tpu_custom_call.1} parent=11 // pred_check_branch
          %242 = sbr.rel (%p240) target = $region20
        $region19: #{tpu_custom_call.1} parent=11 // pred_region
          _
        $region20: #{tpu_custom_call.1} parent=11 // pred_fallthru
          _
        // Predicated region
        $region21: #{tpu_custom_call.1} parent=11 // pred_check
          %p243 = pneg %p138
        $region22: #{tpu_custom_call.1} parent=11 // pred_check_branch
          %245 = sbr.rel (%p243) target = $region24
        $region23: #{tpu_custom_call.1} parent=11 // pred_region
          _
        $region24: #{tpu_custom_call.1} parent=11 // pred_fallthru
          _
        // Predicated region
        $region25: #{tpu_custom_call.1} parent=11 // pred_check
          %p246 = pneg %p159
        $region26: #{tpu_custom_call.1} parent=11 // pred_check_branch
          %248 = sbr.rel (%p246) target = $region28
        $region27: #{tpu_custom_call.1} parent=11 // pred_region
          %s250 = ssub.s32 1024, 1024
          %251 = vsyncadd [#allocation7], %s250
          %s252 = sshll.u32 [#allocation8], 4
          %s253 = int_to_ptr.vmem [resolvable:$true] %s252
          %258 = dma.hbm_to_vmem [thread:$0]  %s5, 1024, %s253, [#allocation7], 64, 64, 4
        $region28: #{tpu_custom_call.1} parent=11 // pred_fallthru
          _
        // Predicated region
        $region29: #{tpu_custom_call.1} parent=11 // pred_check
          %p259 = pneg %p180
        $region30: #{tpu_custom_call.1} parent=11 // pred_check_branch
          %261 = sbr.rel (%p259) target = $region32
        $region31: #{tpu_custom_call.1} parent=11 // pred_region
          _
        $region32: #{tpu_custom_call.1} parent=11 // pred_fallthru
          _
      $region12: #{tpu_custom_call.1} parent=5 // pred_fallthru
        _
      %p262 = scmp.lt.s32.totalorder %s23, 2
      // Predicated region
      $region33: #{tpu_custom_call.1} parent=5 // pred_check
        %p263 = pneg %p262
      $region34: #{tpu_custom_call.1} parent=5 // pred_check_branch
        %265 = sbr.rel (%p263) target = $region36
      $region35: #{tpu_custom_call.1} parent=5 // pred_region
        // Predicated region
        $region37: #{tpu_custom_call.1} parent=35 // pred_check
          %p266 = pneg %p43
        $region38: #{tpu_custom_call.1} parent=35 // pred_check_branch
          %268 = sbr.rel (%p266) target = $region40
        $region39: #{tpu_custom_call.1} parent=35 // pred_region
          %s269 = sand.u32 %s33, 1
          %s270 = scalar_lea.sflag [#allocation4], %s269
          %s271 = sand.u32 %s33, 1
          %s272 = smul.addr %s271, 16
          %s273 = scalar_lea.vmem [#allocation3], %s272
          %s274 = smul.u32 4, %s23
          %s276 = ssub.s32 256, 256
          %277 = vsyncadd %s270, %s276
          %s278 = smul.addr %s274, 64
          %s279 = scalar_lea.hbm %s0, %s278
          %s281 = sshll.u32 %s273, 4
          %s282 = int_to_ptr.vmem [resolvable:$true] %s281
          %284 = dma.hbm_to_vmem [thread:$0]  %s279, 256, %s282, %s270
        $region40: #{tpu_custom_call.1} parent=35 // pred_fallthru
          _
        // Predicated region
        $region41: #{tpu_custom_call.1} parent=35 // pred_check
          %p285 = pneg %p69
        $region42: #{tpu_custom_call.1} parent=35 // pred_check_branch
          %287 = sbr.rel (%p285) target = $region44
        $region43: #{tpu_custom_call.1} parent=35 // pred_region
          %s288 = sand.u32 %s23, 1
          %s289 = scalar_lea.sflag [#allocation7], %s288
          %s290 = sand.u32 %s59, 1
          %s291 = smul.addr %s290, 256
          %s292 = scalar_lea.vmem [#allocation6], %s291
          %s293 = smul.u32 64, %s23
          %s295 = ssub.s32 4096, 4096
          %296 = vsyncadd %s289, %s295
          %s297 = smul.addr %s293, 64
          %s298 = scalar_lea.hbm %s1, %s297
          %s299 = sshll.u32 %s292, 4
          %s300 = int_to_ptr.vmem [resolvable:$true] %s299
          %305 = dma.hbm_to_vmem [thread:$0]  %s298, 4096, %s300, %s289, 64, 64, 4
        $region44: #{tpu_custom_call.1} parent=35 // pred_fallthru
          _
      $region36: #{tpu_custom_call.1} parent=5 // pred_fallthru
        _
      %p306 = scmp.le.s32.totalorder 1, %s23
      %p307 = scmp.lt.s32.totalorder %s23, 3
      %p308 = pnand %p306, %p307
      %p309 = pneg %p308
      // Predicated region
      $region45: #{tpu_custom_call.1} parent=5 // pred_check
        _
      $region46: #{tpu_custom_call.1} parent=5 // pred_check_branch
        %311 = sbr.rel (%p308) target = $region48
      $region47: #{tpu_custom_call.1} parent=5 // pred_region
        %s312 = ssub.s32 %s23, 1
        %s313 = sand.u32 %s36, 1
        %s314 = scalar_lea.sflag [#allocation4], %s313
        %s315 = sand.u32 %s36, 1
        %s316 = smul.addr %s315, 16
        %s317 = scalar_lea.vmem [#allocation3], %s316
        // Predicated region
        $region49: #{tpu_custom_call.1} parent=47 // pred_check
          %p318 = pneg %p49
        $region50: #{tpu_custom_call.1} parent=47 // pred_check_branch
          %320 = sbr.rel (%p318) target = $region52
        $region51: #{tpu_custom_call.1} parent=47 // pred_region
          %321 = dma.done %s314, 256
        $region52: #{tpu_custom_call.1} parent=47 // pred_fallthru
          _
        %s322 = sand.u32 %s28, 1
        %s323 = scalar_lea.sflag [#allocation7], %s322
        %s324 = sand.u32 %s62, 1
        %s325 = smul.addr %s324, 256
        %s326 = scalar_lea.vmem [#allocation6], %s325
        // Predicated region
        $region53: #{tpu_custom_call.1} parent=47 // pred_check
          %p327 = pneg %p75
        $region54: #{tpu_custom_call.1} parent=47 // pred_check_branch
          %329 = sbr.rel (%p327) target = $region56
        $region55: #{tpu_custom_call.1} parent=47 // pred_region
          %330 = dma.done %s323, 4096
        $region56: #{tpu_custom_call.1} parent=47 // pred_fallthru
          _
        // Predicated region
        $region57: #{tpu_custom_call.1} parent=47 // pred_check
          %p331 = pneg %p159
        $region58: #{tpu_custom_call.1} parent=47 // pred_check_branch
          %333 = sbr.rel (%p331) target = $region60
        $region59: #{tpu_custom_call.1} parent=47 // pred_region
          %334 = dma.done [#allocation7], 1024
        $region60: #{tpu_custom_call.1} parent=47 // pred_fallthru
          _
        %s335 = sand.u32 %s36, 1
        %s336 = scalar_lea.sflag [#allocation4], %s335
        %s337 = sand.u32 %s36, 1
        %s338 = smul.addr %s337, 16
        %s339 = scalar_lea.vmem [#allocation3], %s338
        %p340 = pneg %p49
        %p341 = pneg %p46
        %s342 = sand.u32 %s28, 1
        %s343 = scalar_lea.sflag [#allocation7], %s342
        %s344 = sand.u32 %s62, 1
        %s345 = smul.addr %s344, 256
        %s346 = scalar_lea.vmem [#allocation6], %s345
        %p347 = pneg %p75
        %p348 = pneg %p72
        %p349 = pneg %p96
        %p350 = pneg %p93
        %p351 = pneg %p117
        %p352 = pneg %p114
        %p353 = pneg %p138
        %p354 = pneg %p135
        %p355 = pneg %p159
        %p356 = pneg %p156
        %p357 = pneg %p180
        %p358 = pneg %p177
        %p359 = pneg %p201
        %p360 = pneg %p198
        %p361 = pneg %p222
        %p362 = pneg %p219
        %s363 = smul.u32 4, %s28
        %s364 = smul.u32 64, %s28
        %p366 = scmp.eq.s32.totalorder %s28, 0
        // Predicated region
        $region61: #{tpu_custom_call.1} parent=47 // pred_check
          %p367 = pneg %p366
        $region62: #{tpu_custom_call.1} parent=47 // pred_check_branch
          %369 = sbr.rel (%p367) target = $region64
        $region63: #{tpu_custom_call.1} parent=47 // pred_region
          %370 = vst [vmem:[#allocation2] sm:$0xff] 0.0
        $region64: #{tpu_custom_call.1} parent=47 // pred_fallthru
          _
        %v371 = vld [vmem:[#allocation2] sm:$0xff]
        %v372 = vld [vmem:[%s317] sm:$0xff]
        %v373 = vld [vmem:[%s317 + $0x8] sm:$0xff]
        %v374 = vld [vmem:[%s326] sm:$0xf]
        %v375 = vld [vmem:[%s326 + $0x4] sm:$0xf]
        %v376 = vld [vmem:[%s326 + $0x8] sm:$0xf]
        %v377 = vld [vmem:[%s326 + $0xc] sm:$0xf]
        %v378 = vld [vmem:[%s326 + $0x10] sm:$0xf]
        %v379 = vld [vmem:[%s326 + $0x14] sm:$0xf]
        %v380 = vld [vmem:[%s326 + $0x18] sm:$0xf]
        %v381 = vld [vmem:[%s326 + $0x1c] sm:$0xf]
        %v382 = vld [vmem:[%s326 + $0x20] sm:$0xf]
        %v383 = vld [vmem:[%s326 + $0x24] sm:$0xf]
        %v384 = vld [vmem:[%s326 + $0x28] sm:$0xf]
        %v385 = vld [vmem:[%s326 + $0x2c] sm:$0xf]
        %v386 = vld [vmem:[%s326 + $0x30] sm:$0xf]
        %v387 = vld [vmem:[%s326 + $0x34] sm:$0xf]
        %v388 = vld [vmem:[%s326 + $0x38] sm:$0xf]
        %v389 = vld [vmem:[%s326 + $0x3c] sm:$0xf]
        %v390 = vld [vmem:[%s326 + $0x40] sm:$0xf]
        %v391 = vld [vmem:[%s326 + $0x44] sm:$0xf]
        %v392 = vld [vmem:[%s326 + $0x48] sm:$0xf]
        %v393 = vld [vmem:[%s326 + $0x4c] sm:$0xf]
        %v394 = vld [vmem:[%s326 + $0x50] sm:$0xf]
        %v395 = vld [vmem:[%s326 + $0x54] sm:$0xf]
        %v396 = vld [vmem:[%s326 + $0x58] sm:$0xf]
        %v397 = vld [vmem:[%s326 + $0x5c] sm:$0xf]
        %v398 = vld [vmem:[%s326 + $0x60] sm:$0xf]
        %v399 = vld [vmem:[%s326 + $0x64] sm:$0xf]
        %v400 = vld [vmem:[%s326 + $0x68] sm:$0xf]
        %v401 = vld [vmem:[%s326 + $0x6c] sm:$0xf]
        %v402 = vld [vmem:[%s326 + $0x70] sm:$0xf]
        %v403 = vld [vmem:[%s326 + $0x74] sm:$0xf]
        %v404 = vld [vmem:[%s326 + $0x78] sm:$0xf]
        %v405 = vld [vmem:[%s326 + $0x7c] sm:$0xf]
        %v406 = vld [vmem:[%s326 + $0x80] sm:$0xf]
        %v407 = vld [vmem:[%s326 + $0x84] sm:$0xf]
        %v408 = vld [vmem:[%s326 + $0x88] sm:$0xf]
        %v409 = vld [vmem:[%s326 + $0x8c] sm:$0xf]
        %v410 = vld [vmem:[%s326 + $0x90] sm:$0xf]
        %v411 = vld [vmem:[%s326 + $0x94] sm:$0xf]
        %v412 = vld [vmem:[%s326 + $0x98] sm:$0xf]
        %v413 = vld [vmem:[%s326 + $0x9c] sm:$0xf]
        %v414 = vld [vmem:[%s326 + $0xa0] sm:$0xf]
        %v415 = vld [vmem:[%s326 + $0xa4] sm:$0xf]
        %v416 = vld [vmem:[%s326 + $0xa8] sm:$0xf]
        %v417 = vld [vmem:[%s326 + $0xac] sm:$0xf]
        %v418 = vld [vmem:[%s326 + $0xb0] sm:$0xf]
        %v419 = vld [vmem:[%s326 + $0xb4] sm:$0xf]
        %v420 = vld [vmem:[%s326 + $0xb8] sm:$0xf]
        %v421 = vld [vmem:[%s326 + $0xbc] sm:$0xf]
        %v422 = vld [vmem:[%s326 + $0xc0] sm:$0xf]
        %v423 = vld [vmem:[%s326 + $0xc4] sm:$0xf]
        %v424 = vld [vmem:[%s326 + $0xc8] sm:$0xf]
        %v425 = vld [vmem:[%s326 + $0xcc] sm:$0xf]
        %v426 = vld [vmem:[%s326 + $0xd0] sm:$0xf]
        %v427 = vld [vmem:[%s326 + $0xd4] sm:$0xf]
        %v428 = vld [vmem:[%s326 + $0xd8] sm:$0xf]
        %v429 = vld [vmem:[%s326 + $0xdc] sm:$0xf]
        %v430 = vld [vmem:[%s326 + $0xe0] sm:$0xf]
        %v431 = vld [vmem:[%s326 + $0xe4] sm:$0xf]
        %v432 = vld [vmem:[%s326 + $0xe8] sm:$0xf]
        %v433 = vld [vmem:[%s326 + $0xec] sm:$0xf]
        %v434 = vld [vmem:[%s326 + $0xf0] sm:$0xf]
        %v435 = vld [vmem:[%s326 + $0xf4] sm:$0xf]
        %v436 = vld [vmem:[%s326 + $0xf8] sm:$0xf]
        %v437 = vld [vmem:[%s326 + $0xfc] sm:$0xf]
        %v440 = vunpack.c.l.b16 %v372
        %v441 = vunpack.c.h.b16 %v372
        %v442 = vunpack.c.l.b16 %v373
        %v443 = vunpack.c.h.b16 %v373
        %v444 = vpack.c.b16 %v440, %v440
        %v445 = vpack.c.b16 %v441, %v441
        %v446 = vpack.c.b16 %v442, %v442
        %v447 = vpack.c.b16 %v443, %v443
        %v516 = vunpack.c.l.b16 %v374
        %v517 = vunpack.c.l.b16 %v375
        %v518 = vunpack.c.l.b16 %v376
        %v519 = vunpack.c.l.b16 %v377
        %v520 = vunpack.c.l.b16 %v378
        %v521 = vunpack.c.l.b16 %v379
        %v522 = vunpack.c.l.b16 %v380
        %v523 = vunpack.c.l.b16 %v381
        %v524 = vunpack.c.l.b16 %v382
        %v525 = vunpack.c.l.b16 %v383
        %v526 = vunpack.c.l.b16 %v384
        %v527 = vunpack.c.l.b16 %v385
        %v528 = vunpack.c.l.b16 %v386
        %v529 = vunpack.c.l.b16 %v387
        %v530 = vunpack.c.l.b16 %v388
        %v531 = vunpack.c.l.b16 %v389
        %v532 = vunpack.c.l.b16 %v390
        %v533 = vunpack.c.l.b16 %v391
        %v534 = vunpack.c.l.b16 %v392
        %v535 = vunpack.c.l.b16 %v393
        %v536 = vunpack.c.l.b16 %v394
        %v537 = vunpack.c.l.b16 %v395
        %v538 = vunpack.c.l.b16 %v396
        %v539 = vunpack.c.l.b16 %v397
        %v540 = vunpack.c.l.b16 %v398
        %v541 = vunpack.c.l.b16 %v399
        %v542 = vunpack.c.l.b16 %v400
        %v543 = vunpack.c.l.b16 %v401
        %v544 = vunpack.c.l.b16 %v402
        %v545 = vunpack.c.l.b16 %v403
        %v546 = vunpack.c.l.b16 %v404
        %v547 = vunpack.c.l.b16 %v405
        %v548 = vunpack.c.l.b16 %v406
        %v549 = vunpack.c.l.b16 %v407
        %v550 = vunpack.c.l.b16 %v408
        %v551 = vunpack.c.l.b16 %v409
        %v552 = vunpack.c.l.b16 %v410
        %v553 = vunpack.c.l.b16 %v411
        %v554 = vunpack.c.l.b16 %v412
        %v555 = vunpack.c.l.b16 %v413
        %v556 = vunpack.c.l.b16 %v414
        %v557 = vunpack.c.l.b16 %v415
        %v558 = vunpack.c.l.b16 %v416
        %v559 = vunpack.c.l.b16 %v417
        %v560 = vunpack.c.l.b16 %v418
        %v561 = vunpack.c.l.b16 %v419
        %v562 = vunpack.c.l.b16 %v420
        %v563 = vunpack.c.l.b16 %v421
        %v564 = vunpack.c.l.b16 %v422
        %v565 = vunpack.c.l.b16 %v423
        %v566 = vunpack.c.l.b16 %v424
        %v567 = vunpack.c.l.b16 %v425
        %v568 = vunpack.c.l.b16 %v426
        %v569 = vunpack.c.l.b16 %v427
        %v570 = vunpack.c.l.b16 %v428
        %v571 = vunpack.c.l.b16 %v429
        %v572 = vunpack.c.l.b16 %v430
        %v573 = vunpack.c.l.b16 %v431
        %v574 = vunpack.c.l.b16 %v432
        %v575 = vunpack.c.l.b16 %v433
        %v576 = vunpack.c.l.b16 %v434
        %v577 = vunpack.c.l.b16 %v435
        %v578 = vunpack.c.l.b16 %v436
        %v579 = vunpack.c.l.b16 %v437
        %v580 = vpack.c.b16 %v517, %v516
        %v581 = vpack.c.b16 %v519, %v518
        %v582 = vpack.c.b16 %v521, %v520
        %v583 = vpack.c.b16 %v523, %v522
        %v584 = vpack.c.b16 %v525, %v524
        %v585 = vpack.c.b16 %v527, %v526
        %v586 = vpack.c.b16 %v529, %v528
        %v587 = vpack.c.b16 %v531, %v530
        %v588 = vpack.c.b16 %v533, %v532
        %v589 = vpack.c.b16 %v535, %v534
        %v590 = vpack.c.b16 %v537, %v536
        %v591 = vpack.c.b16 %v539, %v538
        %v592 = vpack.c.b16 %v541, %v540
        %v593 = vpack.c.b16 %v543, %v542
        %v594 = vpack.c.b16 %v545, %v544
        %v595 = vpack.c.b16 %v547, %v546
        %v596 = vpack.c.b16 %v549, %v548
        %v597 = vpack.c.b16 %v551, %v550
        %v598 = vpack.c.b16 %v553, %v552
        %v599 = vpack.c.b16 %v555, %v554
        %v600 = vpack.c.b16 %v557, %v556
        %v601 = vpack.c.b16 %v559, %v558
        %v602 = vpack.c.b16 %v561, %v560
        %v603 = vpack.c.b16 %v563, %v562
        %v604 = vpack.c.b16 %v565, %v564
        %v605 = vpack.c.b16 %v567, %v566
        %v606 = vpack.c.b16 %v569, %v568
        %v607 = vpack.c.b16 %v571, %v570
        %v608 = vpack.c.b16 %v573, %v572
        %v609 = vpack.c.b16 %v575, %v574
        %v610 = vpack.c.b16 %v577, %v576
        %v611 = vpack.c.b16 %v579, %v578
        %644 = vmatprep.subr.bf16.mxu0 0
        %645 = vmatpush1.bf16.msra.mxu0 %v580
        %646 = vmatprep.subr.bf16.mxu0 0
        %647 = vmatpush1.bf16.msra.mxu0 %v581
        %648 = vmatprep.subr.bf16.mxu0 0
        %649 = vmatpush1.bf16.msra.mxu0 %v582
        %650 = vmatprep.subr.bf16.mxu0 0
        %651 = vmatpush1.bf16.msra.mxu0 %v583
        %652 = vmatprep.subr.bf16.mxu0 0
        %653 = vmatpush1.bf16.msra.mxu0 %v584
        %654 = vmatprep.subr.bf16.mxu0 0
        %655 = vmatpush1.bf16.msra.mxu0 %v585
        %656 = vmatprep.subr.bf16.mxu0 0
        %657 = vmatpush1.bf16.msra.mxu0 %v586
        %658 = vmatprep.subr.bf16.mxu0 0
        %659 = vmatpush1.bf16.msra.mxu0 %v587
        %660 = vmatprep.subr.bf16.mxu0 0
        %661 = vmatpush1.bf16.msra.mxu0 %v588
        %662 = vmatprep.subr.bf16.mxu0 0
        %663 = vmatpush1.bf16.msra.mxu0 %v589
        %664 = vmatprep.subr.bf16.mxu0 0
        %665 = vmatpush1.bf16.msra.mxu0 %v590
        %666 = vmatprep.subr.bf16.mxu0 0
        %667 = vmatpush1.bf16.msra.mxu0 %v591
        %668 = vmatprep.subr.bf16.mxu0 0
        %669 = vmatpush1.bf16.msra.mxu0 %v592
        %670 = vmatprep.subr.bf16.mxu0 0
        %671 = vmatpush1.bf16.msra.mxu0 %v593
        %672 = vmatprep.subr.bf16.mxu0 0
        %673 = vmatpush1.bf16.msra.mxu0 %v594
        %674 = vmatprep.subr.bf16.mxu0 0
        %675 = vmatpush1.bf16.msra.mxu0 %v595
        %676 = vmatprep.mubr.bf16.mxu0 %v445
        %677 = vmatmul.mubr.bf16.gmra.mrb[0].mxu0 %v444
        %v678 = vpop.f32.mrb[0].mxu0
        %v679 = vadd.f32 0.0, %v678
        %v680 = vpop.f32.mrb[0].mxu0
        %v681 = vpop.f32.mrb[0].mxu0
        %v682 = vpop.f32.mrb[0].mxu0
        %683 = vdwg.mxu0
        %684 = vmatprep.subr.bf16.mxu0 0
        %685 = vmatpush1.bf16.msra.mxu0 %v596
        %686 = vmatprep.subr.bf16.mxu0 0
        %687 = vmatpush1.bf16.msra.mxu0 %v597
        %688 = vmatprep.subr.bf16.mxu0 0
        %689 = vmatpush1.bf16.msra.mxu0 %v598
        %690 = vmatprep.subr.bf16.mxu0 0
        %691 = vmatpush1.bf16.msra.mxu0 %v599
        %692 = vmatprep.subr.bf16.mxu0 0
        %693 = vmatpush1.bf16.msra.mxu0 %v600
        %694 = vmatprep.subr.bf16.mxu0 0
        %695 = vmatpush1.bf16.msra.mxu0 %v601
        %696 = vmatprep.subr.bf16.mxu0 0
        %697 = vmatpush1.bf16.msra.mxu0 %v602
        %698 = vmatprep.subr.bf16.mxu0 0
        %699 = vmatpush1.bf16.msra.mxu0 %v603
        %700 = vmatprep.subr.bf16.mxu0 0
        %701 = vmatpush1.bf16.msra.mxu0 %v604
        %702 = vmatprep.subr.bf16.mxu0 0
        %703 = vmatpush1.bf16.msra.mxu0 %v605
        %704 = vmatprep.subr.bf16.mxu0 0
        %705 = vmatpush1.bf16.msra.mxu0 %v606
        %706 = vmatprep.subr.bf16.mxu0 0
        %707 = vmatpush1.bf16.msra.mxu0 %v607
        %708 = vmatprep.subr.bf16.mxu0 0
        %709 = vmatpush1.bf16.msra.mxu0 %v608
        %710 = vmatprep.subr.bf16.mxu0 0
        %711 = vmatpush1.bf16.msra.mxu0 %v609
        %712 = vmatprep.subr.bf16.mxu0 0
        %713 = vmatpush1.bf16.msra.mxu0 %v610
        %714 = vmatprep.subr.bf16.mxu0 0
        %715 = vmatpush1.bf16.msra.mxu0 %v611
        %716 = vmatprep.mubr.bf16.mxu0 %v447
        %717 = vmatmul.mubr.bf16.gmra.mrb[0].mxu0 %v446
        %v718 = vpop.f32.mrb[0].mxu0
        %v719 = vadd.f32 %v679, %v718
        %v720 = vpop.f32.mrb[0].mxu0
        %v721 = vpop.f32.mrb[0].mxu0
        %v722 = vpop.f32.mrb[0].mxu0
        %723 = vdwg.mxu0
        %v724 = vadd.f32 %v371, %v719
        %725 = vst [vmem:[#allocation2] sm:$0xff] %v724
        %p726 = scmp.eq.s32.totalorder %s28, 1
        // Predicated region
        $region65: #{tpu_custom_call.1} parent=47 // pred_check
          %p727 = pneg %p726
        $region66: #{tpu_custom_call.1} parent=47 // pred_check_branch
          %729 = sbr.rel (%p727) target = $region68
        $region67: #{tpu_custom_call.1} parent=47 // pred_region
          %v730 = vld [vmem:[#allocation2] sm:$0xff]
          %v731 = vld [vmem:[%s2] sm:$0x1]
          %v733 = vlaneseq
          %v734 = vshrl.u32 %v733, 7
          %v735 = vsub.s32 0, %v734
          %v736 = vrot.slane %v731, %v735
          %v738 = vadd.f32 %v730, %v736
          %739 = vst [vmem:[#allocation9] sm:$0xff] %v738
          %v740 = vlaneseq
          %v741 = vshrl.u32 %v740, 7
          %vm742 = vcmp.lt.s32.totalorder %v741, 2
          %v743 = vsel %vm742, 1, 0
          %v744 = vcvt.s32.f32 %v743
          %v745 = vmul.f32 %v738, %v744
          %v746 = vrot.slane %v745, 4
          %v747 = vadd.f32 %v745, %v746
          %v748 = vrot.slane %v747, 2
          %v749 = vadd.f32 %v747, %v748
          %v750 = vrot.slane %v749, 1
          %v751 = vadd.f32 %v749, %v750
          %v752 = vmul.f32 %v751, 0.5
          %v753 = vsub.f32 %v738, %v752
          %v754 = vmul.f32 %v753, %v744
          %v755 = vmul.f32 %v754, %v754
          %v756 = vrot.slane %v755, 4
          %v757 = vadd.f32 %v755, %v756
          %v758 = vrot.slane %v757, 2
          %v759 = vadd.f32 %v757, %v758
          %v760 = vrot.slane %v759, 1
          %v761 = vadd.f32 %v759, %v760
          %v762 = vmul.f32 %v761, 0.5
          %v763 = vadd.f32 %v762, 1e-05
          %v764 = vrsqrt.pop %v763
          %v765 = vmul.f32 %v753, %v764
          %v766 = vld [vmem:[%s3] sm:$0x1]
          %v768 = vlaneseq
          %v769 = vshrl.u32 %v768, 7
          %v770 = vsub.s32 0, %v769
          %v771 = vrot.slane %v766, %v770
          %v773 = vmul.f32 %v765, %v771
          %v774 = vld [vmem:[%s4] sm:$0x1]
          %v776 = vlaneseq
          %v777 = vshrl.u32 %v776, 7
          %v778 = vsub.s32 0, %v777
          %v779 = vrot.slane %v774, %v778
          %v781 = vadd.f32 %v773, %v779
          %v782 = vmax.f32 %v781, 0.0
          %v783 = vpack.c.bf16 %v782, %v782
          %v784 = vld [vmem:[#allocation8] sm:$0xf]
          %v785 = vld [vmem:[#allocation8 + $0x4] sm:$0xf]
          %v786 = vld [vmem:[#allocation8 + $0x8] sm:$0xf]
          %v787 = vld [vmem:[#allocation8 + $0xc] sm:$0xf]
          %v788 = vld [vmem:[#allocation8 + $0x10] sm:$0xf]
          %v789 = vld [vmem:[#allocation8 + $0x14] sm:$0xf]
          %v790 = vld [vmem:[#allocation8 + $0x18] sm:$0xf]
          %v791 = vld [vmem:[#allocation8 + $0x1c] sm:$0xf]
          %v792 = vld [vmem:[#allocation8 + $0x20] sm:$0xf]
          %v793 = vld [vmem:[#allocation8 + $0x24] sm:$0xf]
          %v794 = vld [vmem:[#allocation8 + $0x28] sm:$0xf]
          %v795 = vld [vmem:[#allocation8 + $0x2c] sm:$0xf]
          %v796 = vld [vmem:[#allocation8 + $0x30] sm:$0xf]
          %v797 = vld [vmem:[#allocation8 + $0x34] sm:$0xf]
          %v798 = vld [vmem:[#allocation8 + $0x38] sm:$0xf]
          %v799 = vld [vmem:[#allocation8 + $0x3c] sm:$0xf]
          %v800 = vld [vmem:[%s6] sm:$0x1]
          %v802 = vlaneseq
          %v803 = vshrl.u32 %v802, 7
          %v804 = vsub.s32 0, %v803
          %v805 = vrot.slane %v800, %v804
          %v823 = vunpack.c.l.b16 %v784
          %v824 = vunpack.c.l.b16 %v785
          %v825 = vunpack.c.l.b16 %v786
          %v826 = vunpack.c.l.b16 %v787
          %v827 = vunpack.c.l.b16 %v788
          %v828 = vunpack.c.l.b16 %v789
          %v829 = vunpack.c.l.b16 %v790
          %v830 = vunpack.c.l.b16 %v791
          %v831 = vunpack.c.l.b16 %v792
          %v832 = vunpack.c.l.b16 %v793
          %v833 = vunpack.c.l.b16 %v794
          %v834 = vunpack.c.l.b16 %v795
          %v835 = vunpack.c.l.b16 %v796
          %v836 = vunpack.c.l.b16 %v797
          %v837 = vunpack.c.l.b16 %v798
          %v838 = vunpack.c.l.b16 %v799
          %v839 = vpack.c.b16 %v824, %v823
          %v840 = vpack.c.b16 %v826, %v825
          %v841 = vpack.c.b16 %v828, %v827
          %v842 = vpack.c.b16 %v830, %v829
          %v843 = vpack.c.b16 %v832, %v831
          %v844 = vpack.c.b16 %v834, %v833
          %v845 = vpack.c.b16 %v836, %v835
          %v846 = vpack.c.b16 %v838, %v837
          %855 = vmatprep.subr.bf16.mxu0 0
          %856 = vmatpush1.bf16.msra.mxu0 %v839
          %857 = vmatprep.subr.bf16.mxu0 0
          %858 = vmatpush1.bf16.msra.mxu0 %v840
          %859 = vmatprep.subr.bf16.mxu0 0
          %860 = vmatpush1.bf16.msra.mxu0 %v841
          %861 = vmatprep.subr.bf16.mxu0 0
          %862 = vmatpush1.bf16.msra.mxu0 %v842
          %863 = vmatprep.subr.bf16.mxu0 0
          %864 = vmatpush1.bf16.msra.mxu0 %v843
          %865 = vmatprep.subr.bf16.mxu0 0
          %866 = vmatpush1.bf16.msra.mxu0 %v844
          %867 = vmatprep.subr.bf16.mxu0 0
          %868 = vmatpush1.bf16.msra.mxu0 %v845
          %869 = vmatprep.subr.bf16.mxu0 0
          %870 = vmatpush1.bf16.msra.mxu0 %v846
          %871 = vmatprep.subr.bf16.mxu0 0
          %872 = vmatpush1.bf16.msra.mxu0 0
          %873 = vmatprep.subr.bf16.mxu0 0
          %874 = vmatpush1.bf16.msra.mxu0 0
          %875 = vmatprep.subr.bf16.mxu0 0
          %876 = vmatpush1.bf16.msra.mxu0 0
          %877 = vmatprep.subr.bf16.mxu0 0
          %878 = vmatpush1.bf16.msra.mxu0 0
          %879 = vmatprep.subr.bf16.mxu0 0
          %880 = vmatpush1.bf16.msra.mxu0 0
          %881 = vmatprep.subr.bf16.mxu0 0
          %882 = vmatpush1.bf16.msra.mxu0 0
          %883 = vmatprep.subr.bf16.mxu0 0
          %884 = vmatpush1.bf16.msra.mxu0 0
          %885 = vmatprep.subr.bf16.mxu0 0
          %886 = vmatpush1.bf16.msra.mxu0 0
          %887 = vmatprep.mubr.bf16.mxu0 0
          %888 = vmatmul.mubr.bf16.gmra.mrb[0].mxu0 %v783
          %v889 = vpop.f32.mrb[0].mxu0
          %v890 = vadd.f32 %v805, %v889
          %v891 = vpop.f32.mrb[0].mxu0
          %v892 = vpop.f32.mrb[0].mxu0
          %v893 = vpop.f32.mrb[0].mxu0
          %894 = vdwg.mxu0
          %895 = vst [vmem:[#allocation10] sm:$0xff] %v890
        $region68: #{tpu_custom_call.1} parent=47 // pred_fallthru
          _
        // Predicated region
        $region69: #{tpu_custom_call.1} parent=47 // pred_check
          %p896 = pneg %p198
        $region70: #{tpu_custom_call.1} parent=47 // pred_check_branch
          %898 = sbr.rel (%p896) target = $region72
        $region71: #{tpu_custom_call.1} parent=47 // pred_region
          %s900 = ssub.s32 128, 128
          %901 = vsyncadd [#allocation5], %s900
          %s903 = sshll.u32 [#allocation9], 4
          %s904 = int_to_ptr.vmem [resolvable:$true] %s903
          %906 = dma.vmem_to_hbm [thread:$0]  %s904, 128, %s7, [#allocation5]
        $region72: #{tpu_custom_call.1} parent=47 // pred_fallthru
          _
        // Predicated region
        $region73: #{tpu_custom_call.1} parent=47 // pred_check
          %p907 = pneg %p219
        $region74: #{tpu_custom_call.1} parent=47 // pred_check_branch
          %909 = sbr.rel (%p907) target = $region76
        $region75: #{tpu_custom_call.1} parent=47 // pred_region
          %s911 = ssub.s32 128, 128
          %912 = vsyncadd [#allocation11], %s911
          %s914 = sshll.u32 [#allocation10], 4
          %s915 = int_to_ptr.vmem [resolvable:$true] %s914
          %917 = dma.vmem_to_hbm [thread:$0]  %s915, 128, %s8, [#allocation11]
        $region76: #{tpu_custom_call.1} parent=47 // pred_fallthru
          _
        // Predicated region
        $region77: #{tpu_custom_call.1} parent=47 // pred_check
          %p918 = pneg %p198
        $region78: #{tpu_custom_call.1} parent=47 // pred_check_branch
          %920 = sbr.rel (%p918) target = $region80
        $region79: #{tpu_custom_call.1} parent=47 // pred_region
          %921 = dma.done [#allocation5], 128
        $region80: #{tpu_custom_call.1} parent=47 // pred_fallthru
          _
        // Predicated region
        $region81: #{tpu_custom_call.1} parent=47 // pred_check
          %p922 = pneg %p219
        $region82: #{tpu_custom_call.1} parent=47 // pred_check_branch
          %924 = sbr.rel (%p922) target = $region84
        $region83: #{tpu_custom_call.1} parent=47 // pred_region
          %925 = dma.done [#allocation11], 128
        $region84: #{tpu_custom_call.1} parent=47 // pred_fallthru
          _
      $region48: #{tpu_custom_call.1} parent=5 // pred_fallthru
        _
      %p926 = scmp.le.s32.totalorder 2, %s23
      // Predicated region
      $region85: #{tpu_custom_call.1} parent=5 // pred_check
        %p927 = pneg %p926
      $region86: #{tpu_custom_call.1} parent=5 // pred_check_branch
        %929 = sbr.rel (%p927) target = $region88
      $region87: #{tpu_custom_call.1} parent=5 // pred_region
        %s930 = ssub.s32 %s23, 2
      $region88: #{tpu_custom_call.1} parent=5 // pred_fallthru
        _
    $region6: #{tpu_custom_call.1} parent=1 // loop_footer
      %s27 = sadd.s32 1, %s23
    $region7: #{tpu_custom_call.1} parent=1 // loop_footer_branch
      %22 = sbr.rel target = $region3
    $region8: #{tpu_custom_call.1} parent=1 // loop_exit
      _
    %931 = vsyncpa [#allocation4], 1
    %s932 = scalar_lea.sflag [#allocation4], 1
    %933 = vsyncpa %s932, 1
    %934 = vsyncpa [#allocation7], 1
    %s935 = scalar_lea.sflag [#allocation7], 1
    %936 = vsyncpa %s935, 1
    %937 = vsyncpa [#allocation5], 1
    %s938 = scalar_lea.sflag [#allocation5], 1
    %939 = vsyncpa %s938, 1
    %940 = vsyncpa [#allocation11], 1

</llo_original>
